<compile_context>
chip_gen: v6e
topology: v6e:2x2x1
jax: 0.10.0
libtpu: 0.0.40
codegen_flags: <defaults>
</compile_context>

<pallas_src>
import jax
import jax.numpy as jnp
from jax.experimental import pallas as pl
from jax.experimental.pallas import tpu as pltpu


def _linear_kernel(w_ref, b_ref, x_ref, o_ref):
    # w_ref, b_ref: (1,) scalars in SMEM (read via the scalar unit).
    # x_ref, o_ref: (tile_r, lane_w) VMEM tiles (lane-dense, full vregs).
    o_ref[...] = x_ref[...] * w_ref[0] + b_ref[0]


def _round_up(v, m):
    return ((v + m - 1) // m) * m


def linear_forward(x, w, b, *, tile_r=1024, max_lane_w=1024,
                   min_pallas_elems=1 << 21):
    """nn.Linear(1, 1) forward: x (..., 1) -> (..., 1), y = x * w + b.

    Uses the Pallas kernel only when it can be run with zero extra HBM copies
    (N % 128 == 0) and the workload is large enough to amortize the launch;
    otherwise falls back to the fused XLA elementwise (already at roofline).
    """
    assert x.shape[-1] == 1, "nn.Linear(1,1) expects trailing feature dim of 1"
    assert w.size == 1, f"nn.Linear(1,1) weight must have 1 element, got shape {w.shape}"
    assert b.size == 1, f"nn.Linear(1,1) bias must have 1 element, got shape {b.shape}"
    assert max_lane_w >= 128 and max_lane_w % 128 == 0

    w_s = w.reshape(-1).astype(x.dtype)   # (1,)
    b_s = b.reshape(-1).astype(x.dtype)   # (1,)

    itemsize = x.dtype.itemsize
    assert itemsize in (1, 2, 4), f"unsupported dtype {x.dtype}"
    sub = 8 * (4 // itemsize)             # sublane multiple: f32->8, bf16->16, int8->32

    n = x.size

    # Largest lane width (multiple of 128) dividing N -> free contiguous reshape
    # and full-width unmasked stores.
    lane_w = next((l for l in (2048, 1024, 512, 256, 128)
                   if l <= max_lane_w and n % l == 0), None)

    if n < min_pallas_elems or lane_w is None:
        # Tiny or lane-misaligned workload: fused XLA elementwise is optimal
        # (no pallas_call launch overhead, no pad/slice copies).
        return x * w_s[0] + b_s[0]

    rows = n // lane_w
    x2d = x.reshape(rows, lane_w)         # free: contiguous view

    # --- tile_r selection ---------------------------------------------------
    # Keep 4 double-buffered tiles (in + out) + headroom <= ~48 MiB so the
    # kernel also fits v7x's 64 MiB per-TC VMEM.
    max_tile_r = max(sub, (((44 << 20) // (4 * lane_w * itemsize)) // sub) * sub)
    tr = min(tile_r, max_tile_r)
    if rows <= sub:
        tr = rows                         # single block == full row extent (allowed)
    else:
        # Multiple of the sublane packing, and at least 2 grid steps so the
        # "parallel" axis can be split across v7x's two TensorCores.
        tr = max(sub, min(_round_up(tr, sub), _round_up(pl.cdiv(rows, 2), sub)))
    num_tiles = pl.cdiv(rows, tr)

    tile_bytes = tr * lane_w * itemsize
    vmem_budget = min(max(4 * tile_bytes + (4 << 20), 16 << 20), 48 << 20)

    y2d = pl.pallas_call(
        _linear_kernel,
        out_shape=jax.ShapeDtypeStruct((rows, lane_w), x.dtype),
        grid=(num_tiles,),
        in_specs=[
            pl.BlockSpec(memory_space=pltpu.MemorySpace.SMEM),  # w scalar
            pl.BlockSpec(memory_space=pltpu.MemorySpace.SMEM),  # b scalar
            pl.BlockSpec((tr, lane_w), lambda i: (i, 0)),       # x tile
        ],
        out_specs=pl.BlockSpec((tr, lane_w), lambda i: (i, 0)),
        compiler_params=pltpu.CompilerParams(
            dimension_semantics=("parallel",),
            vmem_limit_bytes=vmem_budget,
        ),
    )(w_s, b_s, x2d)

    return y2d.reshape(x.shape)           # free: contiguous view


if __name__ == "__main__":
    key = jax.random.PRNGKey(0)
    kx1, kx2, kx3, kw, kb = jax.random.split(key, 5)

    # Parameters of nn.Linear(1, 1).
    w = jax.random.uniform(kw, (1, 1), jnp.float32, minval=-1.0, maxval=1.0)
    b = jax.random.uniform(kb, (1,), jnp.float32, minval=-1.0, maxval=1.0)

    # --- Pallas path 1: multi-step grid with a ragged last row-block.
    # batch = 17 * 128 -> lane_w = 128, rows = 17; tile_r = 8 -> 3 grid steps,
    # last block has only 1 valid row (exercises masked ragged writes).
    x1 = jax.random.normal(kx1, (2176, 1), jnp.float32)
    y1 = linear_forward(x1, w, b, tile_r=8, max_lane_w=128, min_pallas_elems=0)
    jax.block_until_ready(y1)
    assert y1.shape == x1.shape
    assert jnp.allclose(y1, x1 @ w.T + b, atol=1e-6, rtol=1e-6), "pallas (ragged grid) mismatch"

    # --- Pallas path 2: single full-extent block (rows < sublane multiple).
    x2 = jax.random.normal(kx2, (4096, 1), jnp.float32)
    y2 = linear_forward(x2, w, b, min_pallas_elems=0)
    jax.block_until_ready(y2)
    assert jnp.allclose(y2, x2 @ w.T + b, atol=1e-6, rtol=1e-6), "pallas (single block) mismatch"

    # --- Fused-XLA fallback paths (misaligned N; tiny N). No kernel launch.
    x3 = jax.random.normal(kx3, (3000, 1), jnp.float32)
    y3 = linear_forward(x3, w, b)
    x4 = x3[:8]
    y4 = linear_forward(x4, w, b)
    jax.block_until_ready((y3, y4))
    assert jnp.allclose(y3, x3 @ w.T + b, atol=1e-6, rtol=1e-6), "fallback (misaligned) mismatch"
    assert jnp.allclose(y4, x4 @ w.T + b, atol=1e-6, rtol=1e-6), "fallback (tiny) mismatch"

    print("KERNEL_OK")
</pallas_src>

<mosaic_0001>
module attributes {stable_mosaic.version = 11 : i64} {
  func.func @_linear_kernel(%arg0: i32, %arg1: memref<1xf32, #tpu.memory_space<smem>>, %arg2: memref<1xf32, #tpu.memory_space<smem>>, %arg3: memref<8x128xf32, #tpu.memory_space<vmem>>, %arg4: memref<8x128xf32, #tpu.memory_space<vmem>>) attributes {dimension_semantics = [#tpu.dimension_semantics<parallel>], iteration_bounds = array<i64: 3>, scalar_prefetch = 0 : i64, scratch_operands = 0 : i64, tpu.core_type = #tpu.core_type<tc>, window_params = [{transform_indices = @transform_0, window_bounds = array<i64: 1>}, {transform_indices = @transform_1, window_bounds = array<i64: 1>}, {transform_indices = @transform_2, window_bounds = array<i64: 8, 128>}, {transform_indices = @transform_3, window_bounds = array<i64: 8, 128>}]} {
    %c0 = arith.constant 0 : index
    %c0_0 = arith.constant 0 : index
    %0 = vector.load %arg3[%c0, %c0_0] : memref<8x128xf32, #tpu.memory_space<vmem>>, vector<8x128xf32>
    %c0_1 = arith.constant 0 : index
    %1 = memref.load %arg1[%c0_1] : memref<1xf32, #tpu.memory_space<smem>>
    %2 = vector.broadcast %1 : f32 to vector<8x128xf32>
    %3 = arith.mulf %0, %2 : vector<8x128xf32>
    %c0_2 = arith.constant 0 : index
    %4 = memref.load %arg2[%c0_2] : memref<1xf32, #tpu.memory_space<smem>>
    %5 = vector.broadcast %4 : f32 to vector<8x128xf32>
    %6 = arith.addf %3, %5 : vector<8x128xf32>
    %c0_3 = arith.constant 0 : index
    %c0_4 = arith.constant 0 : index
    %7 = vector.load %arg4[%c0_3, %c0_4] : memref<8x128xf32, #tpu.memory_space<vmem>>, vector<8x128xf32>
    tpu.vector_store %arg4[%c0_3, %c0_4], %6 {strides = array<i32>} : memref<8x128xf32, #tpu.memory_space<vmem>>, vector<8x128xf32>,
    return
  }
  func.func @transform_0(%arg0: i32) -> i32 {
    %c0_i32 = arith.constant 0 : i32
    %c0_i32_0 = arith.constant 0 : i32
    return %c0_i32 : i32
  }
  func.func @transform_1(%arg0: i32) -> i32 {
    %c0_i32 = arith.constant 0 : i32
    %c0_i32_0 = arith.constant 0 : i32
    return %c0_i32 : i32
  }
  func.func @transform_2(%arg0: i32) -> (i32, i32) {
    %c0_i32 = arith.constant 0 : i32
    %c0_i32_0 = arith.constant 0 : i32
    return %arg0, %c0_i32 : i32, i32
  }
  func.func @transform_3(%arg0: i32) -> (i32, i32) {
    %c0_i32 = arith.constant 0 : i32
    %c0_i32_0 = arith.constant 0 : i32
    return %arg0, %c0_i32 : i32, i32
  }
}

</mosaic_0001>

<llo_original>
// kernel: tpu_custom_call.1
$region0: #{tpu_custom_call.1}
  #allocation0 [shape = 'u32[]', space=smem, size = 0x4, offset = 0x4, fixed_abs, tag = 'smem constant byte address 0x4 - core index']
  #allocation1 [shape = 'u32[144,128]{1,0:T(1,128)}', space=vmem, size = 0x12000, scoped, tag = 'internal scratch']
  #allocation2 [shape = 'f32[1]{0:T(128)S(6)}', space=smem, size = 0x200, scoped, tag = 'scoped memory for tpu_custom_call.1']
  #allocation3 [shape = 'f32[1]{0:T(128)S(6)}', space=smem, size = 0x200, scoped, tag = 'scoped memory for tpu_custom_call.1']
  %s0 = inlined_call_operand.<no memory space> [shape: f32[1], index: 0, kind: input, shape index: {}]
  %s1 = inlined_call_operand.<no memory space> [shape: f32[1], index: 1, kind: input, shape index: {}]
  %s2 = inlined_call_operand.hbm [shape: f32[17,128], index: 2, kind: input, shape index: {}]
  %s3 = inlined_call_operand.hbm [shape: f32[17,128], index: 3, kind: output, shape index: {}]
  %s4 = sld [smem:[#allocation0]]
  $region49: #{tpu_custom_call.1} parent=0
    _
  %s6 = ssub.s32 1, %s4
  %s7 = scalar_select 0, %s6, %s4
  %8 = sst [smem:[#allocation2]] %s0
  %9 = sst [smem:[#allocation3]] %s1
  $region1: #{tpu_custom_call.1} parent=0
    #allocation4 [shape = 'u8[8192]{0}', space=vmem, size = 0x2000, scoped, tag = 'input window, operand 2']
    #allocation5 [shape = 's32[2]{0}', space=sflag, size = 0x8, scoped, tag = 'scoped memory for tpu_custom_call.1']
    #allocation6 [shape = 's32[2]{0}', space=sflag, size = 0x8, scoped, tag = 'scoped memory for tpu_custom_call.1']
    #allocation7 [shape = 'u8[8192]{0}', space=vmem, size = 0x2000, scoped, tag = 'output window, operand 0']
    %10 = vsyncpa [#allocation5], 0
    %s11 = scalar_lea.sflag [#allocation5], 1
    %12 = vsyncpa %s11, 0
    %13 = vsyncpa [#allocation6], 0
    %s14 = scalar_lea.sflag [#allocation6], 1
    %15 = vsyncpa %s14, 0
    loop: start=0, step=1, limit=5
    $region2: #{tpu_custom_call.1} parent=1 // loop_pre_header
      _
    $region3: #{tpu_custom_call.1} parent=1 // loop_header
      %s17 = sphi 0, %s21
      %p18 = scmp.ge.s32.totalorder %s17, 5
      %s25 = sphi 0, %s25
      %s27 = sphi 0, %s25
      %s28 = sphi 0, %s27
      %s42 = sphi 0, %s28
      %s46 = sphi 0, %s46
      %s48 = sphi 0, %s46
      %s49 = sphi 0, %s48
      %s63 = sphi 0, %s49
      %s69 = sphi 0, %s71
      %s72 = sphi 0, %s69
      %s73 = sphi 0, %s72
      %s89 = sphi 0, %s73
      %s95 = sphi 0, %s97
      %s98 = sphi 0, %s95
      %s99 = sphi 0, %s98
      %s115 = sphi 0, %s99
    $region4: #{tpu_custom_call.1} parent=1 // loop_header_branch
      %20 = sbr.rel (%p18) target = $region8
    $region5: #{tpu_custom_call.1} parent=1 // loop_body
      %s22 = ssub.s32 %s17, 1
      %s23 = ssub.s32 %s17, 2
      %s24 = sadd.s32 %s17, 1
      %s26 = sadd.s32 %s25, 1
      %p29 = scmp.eq.s32.totalorder %s17, 2
      %p30 = scmp.ne.s32.totalorder %s25, %s27
      %p31 = scmp.eq.s32.totalorder %s17, 0
      %p32 = por %p30, %p31
      %p33 = scmp.ne.s32.totalorder %s25, %s27
      %p34 = scmp.eq.s32.totalorder %s22, 2
      %p35 = por %p33, %p34
      %p36 = scmp.ne.s32.totalorder %s27, %s28
      %p37 = scmp.eq.s32.totalorder %s22, 0
      %p38 = por %p36, %p37
      %p39 = scmp.ne.s32.totalorder %s27, %s28
      %p40 = scmp.eq.s32.totalorder %s23, 2
      %p41 = por %p39, %p40
      %p43 = scmp.ne.s32.totalorder %s28, %s42
      %p44 = scmp.eq.s32.totalorder %s23, 0
      %p45 = por %p43, %p44
      %s47 = sadd.s32 %s46, 1
      %p50 = scmp.eq.s32.totalorder %s17, 2
      %p51 = scmp.ne.s32.totalorder %s46, %s48
      %p52 = scmp.eq.s32.totalorder %s17, 0
      %p53 = por %p51, %p52
      %p54 = scmp.ne.s32.totalorder %s46, %s48
      %p55 = scmp.eq.s32.totalorder %s22, 2
      %p56 = por %p54, %p55
      %p57 = scmp.ne.s32.totalorder %s48, %s49
      %p58 = scmp.eq.s32.totalorder %s22, 0
      %p59 = por %p57, %p58
      %p60 = scmp.ne.s32.totalorder %s48, %s49
      %p61 = scmp.eq.s32.totalorder %s23, 2
      %p62 = por %p60, %p61
      %p64 = scmp.ne.s32.totalorder %s49, %s63
      %p65 = scmp.eq.s32.totalorder %s23, 0
      %p66 = por %p64, %p65
      %s67 = ssub.s32 %s17, %s24
      %p68 = scmp.eq.s32.totalorder %s67, 0
      %s70 = sadd.s32 %s69, 1
      %s71 = scalar_select %p68, %s69, %s70
      %p74 = pneg %p68
      %p75 = scmp.eq.s32.totalorder %s17, 2
      %p76 = por %p74, %p75
      %p77 = scmp.ne.s32.totalorder %s69, %s72
      %p78 = scmp.eq.s32.totalorder %s17, 0
      %p79 = por %p77, %p78
      %p80 = scmp.ne.s32.totalorder %s69, %s72
      %p81 = scmp.eq.s32.totalorder %s22, 2
      %p82 = por %p80, %p81
      %p83 = scmp.ne.s32.totalorder %s72, %s73
      %p84 = scmp.eq.s32.totalorder %s22, 0
      %p85 = por %p83, %p84
      %p86 = scmp.ne.s32.totalorder %s72, %s73
      %p87 = scmp.eq.s32.totalorder %s23, 2
      %p88 = por %p86, %p87
      %p90 = scmp.ne.s32.totalorder %s73, %s89
      %p91 = scmp.eq.s32.totalorder %s23, 0
      %p92 = por %p90, %p91
      %s93 = ssub.s32 %s17, %s24
      %p94 = scmp.eq.s32.totalorder %s93, 0
      %s96 = sadd.s32 %s95, 1
      %s97 = scalar_select %p94, %s95, %s96
      %p100 = pneg %p94
      %p101 = scmp.eq.s32.totalorder %s17, 2
      %p102 = por %p100, %p101
      %p103 = scmp.ne.s32.totalorder %s95, %s98
      %p104 = scmp.eq.s32.totalorder %s17, 0
      %p105 = por %p103, %p104
      %p106 = scmp.ne.s32.totalorder %s95, %s98
      %p107 = scmp.eq.s32.totalorder %s22, 2
      %p108 = por %p106, %p107
      %p109 = scmp.ne.s32.totalorder %s98, %s99
      %p110 = scmp.eq.s32.totalorder %s22, 0
      %p111 = por %p109, %p110
      %p112 = scmp.ne.s32.totalorder %s98, %s99
      %p113 = scmp.eq.s32.totalorder %s23, 2
      %p114 = por %p112, %p113
      %p116 = scmp.ne.s32.totalorder %s99, %s115
      %p117 = scmp.eq.s32.totalorder %s23, 0
      %p118 = por %p116, %p117
      %p119 = scmp.le.s32.totalorder 1, %s17
      %p120 = scmp.lt.s32.totalorder %s17, 4
      %p121 = pnand %p119, %p120
      %p122 = pneg %p121
      // Predicated region
      $region9: #{tpu_custom_call.1} parent=5 // pred_check
        _
      $region10: #{tpu_custom_call.1} parent=5 // pred_check_branch
        %124 = sbr.rel (%p121) target = $region12
      $region11: #{tpu_custom_call.1} parent=5 // pred_region
        %s125 = ssub.s32 %s17, 1
        // Predicated region
        $region13: #{tpu_custom_call.1} parent=11 // pred_check
          %p126 = pneg %p38
        $region14: #{tpu_custom_call.1} parent=11 // pred_check_branch
          %128 = sbr.rel (%p126) target = $region16
        $region15: #{tpu_custom_call.1} parent=11 // pred_region
          _
        $region16: #{tpu_custom_call.1} parent=11 // pred_fallthru
          _
        // Predicated region
        $region17: #{tpu_custom_call.1} parent=11 // pred_check
          %p129 = pneg %p59
        $region18: #{tpu_custom_call.1} parent=11 // pred_check_branch
          %131 = sbr.rel (%p129) target = $region20
        $region19: #{tpu_custom_call.1} parent=11 // pred_region
          _
        $region20: #{tpu_custom_call.1} parent=11 // pred_fallthru
          _
      $region12: #{tpu_custom_call.1} parent=5 // pred_fallthru
        _
      %p132 = scmp.lt.s32.totalorder %s17, 3
      // Predicated region
      $region21: #{tpu_custom_call.1} parent=5 // pred_check
        %p133 = pneg %p132
      $region22: #{tpu_custom_call.1} parent=5 // pred_check_branch
        %135 = sbr.rel (%p133) target = $region24
      $region23: #{tpu_custom_call.1} parent=5 // pred_region
        // Predicated region
        $region25: #{tpu_custom_call.1} parent=23 // pred_check
          %p136 = pneg %p79
        $region26: #{tpu_custom_call.1} parent=23 // pred_check_branch
          %138 = sbr.rel (%p136) target = $region28
        $region27: #{tpu_custom_call.1} parent=23 // pred_region
          %s139 = sand.u32 %s69, 1
          %s140 = scalar_lea.sflag [#allocation5], %s139
          %s141 = sand.u32 %s69, 1
          %s142 = smul.addr %s141, 8
          %s143 = scalar_lea.vmem [#allocation4], %s142
          %s145 = ssub.s32 128, 128
          %146 = vsyncadd %s140, %s145
          %s147 = smul.addr %s17, 128
          %s148 = scalar_lea.hbm %s2, %s147
          %s150 = sshll.u32 %s143, 4
          %s151 = int_to_ptr.vmem [resolvable:$true] %s150
          %153 = dma.hbm_to_vmem [thread:$0]  %s148, 128, %s151, %s140
        $region28: #{tpu_custom_call.1} parent=23 // pred_fallthru
          _
      $region24: #{tpu_custom_call.1} parent=5 // pred_fallthru
        _
      %p154 = scmp.le.s32.totalorder 1, %s17
      %p155 = scmp.lt.s32.totalorder %s17, 4
      %p156 = pnand %p154, %p155
      %p157 = pneg %p156
      // Predicated region
      $region29: #{tpu_custom_call.1} parent=5 // pred_check
        _
      $region30: #{tpu_custom_call.1} parent=5 // pred_check_branch
        %159 = sbr.rel (%p156) target = $region32
      $region31: #{tpu_custom_call.1} parent=5 // pred_region
        %s160 = ssub.s32 %s17, 1
        %s161 = sand.u32 %s72, 1
        %s162 = scalar_lea.sflag [#allocation5], %s161
        %s163 = sand.u32 %s72, 1
        %s164 = smul.addr %s163, 8
        %s165 = scalar_lea.vmem [#allocation4], %s164
        // Predicated region
        $region33: #{tpu_custom_call.1} parent=31 // pred_check
          %p166 = pneg %p85
        $region34: #{tpu_custom_call.1} parent=31 // pred_check_branch
          %168 = sbr.rel (%p166) target = $region36
        $region35: #{tpu_custom_call.1} parent=31 // pred_region
          %169 = dma.done %s162, 128
        $region36: #{tpu_custom_call.1} parent=31 // pred_fallthru
          _
        %p170 = pneg %p38
        %p171 = pneg %p35
        %p172 = pneg %p59
        %p173 = pneg %p56
        %s174 = sand.u32 %s72, 1
        %s175 = scalar_lea.sflag [#allocation5], %s174
        %s176 = sand.u32 %s72, 1
        %s177 = smul.addr %s176, 8
        %s178 = scalar_lea.vmem [#allocation4], %s177
        %p179 = pneg %p85
        %p180 = pneg %p82
        %p181 = pneg %p111
        %p182 = pneg %p108
        %s183 = sand.u32 %s98, 1
        %s184 = scalar_lea.sflag [#allocation6], %s183
        %s185 = sand.u32 %s98, 1
        %s186 = smul.addr %s185, 8
        %s187 = scalar_lea.vmem [#allocation7], %s186
        %v188 = vld [vmem:[%s165] sm:$0xff]
        %s189 = sld [smem:[#allocation2]]
        %v190 = vstv %s189
        %v191 = vmul.f32 %v188, %v190
        %s192 = sld [smem:[#allocation3]]
        %v193 = vstv %s192
        %v194 = vadd.f32 %v191, %v193
        %195 = vst [vmem:[%s187] sm:$0xff] %v194
        %s196 = sand.u32 %s98, 1
        %s197 = scalar_lea.sflag [#allocation6], %s196
        %s198 = sand.u32 %s98, 1
        %s199 = smul.addr %s198, 8
        %s200 = scalar_lea.vmem [#allocation7], %s199
        // Predicated region
        $region37: #{tpu_custom_call.1} parent=31 // pred_check
          %p201 = pneg %p108
        $region38: #{tpu_custom_call.1} parent=31 // pred_check_branch
          %203 = sbr.rel (%p201) target = $region40
        $region39: #{tpu_custom_call.1} parent=31 // pred_region
          %s205 = ssub.s32 128, 128
          %206 = vsyncadd %s197, %s205
          %s207 = smul.addr %s22, 128
          %s208 = scalar_lea.hbm %s3, %s207
          %s210 = sshll.u32 %s200, 4
          %s211 = int_to_ptr.vmem [resolvable:$true] %s210
          %213 = dma.vmem_to_hbm [thread:$0]  %s211, 128, %s208, %s197
        $region40: #{tpu_custom_call.1} parent=31 // pred_fallthru
          _
      $region32: #{tpu_custom_call.1} parent=5 // pred_fallthru
        _
      %p214 = scmp.le.s32.totalorder 2, %s17
      // Predicated region
      $region41: #{tpu_custom_call.1} parent=5 // pred_check
        %p215 = pneg %p214
      $region42: #{tpu_custom_call.1} parent=5 // pred_check_branch
        %217 = sbr.rel (%p215) target = $region44
      $region43: #{tpu_custom_call.1} parent=5 // pred_region
        %s218 = ssub.s32 %s17, 2
        // Predicated region
        $region45: #{tpu_custom_call.1} parent=43 // pred_check
          %p219 = pneg %p114
        $region46: #{tpu_custom_call.1} parent=43 // pred_check_branch
          %221 = sbr.rel (%p219) target = $region48
        $region47: #{tpu_custom_call.1} parent=43 // pred_region
          %s222 = sand.u32 %s99, 1
          %s223 = scalar_lea.sflag [#allocation6], %s222
          %s224 = sand.u32 %s99, 1
          %s225 = smul.addr %s224, 8
          %s226 = scalar_lea.vmem [#allocation7], %s225
          %227 = dma.done %s223, 128
        $region48: #{tpu_custom_call.1} parent=43 // pred_fallthru
          _
      $region44: #{tpu_custom_call.1} parent=5 // pred_fallthru
        _
    $region6: #{tpu_custom_call.1} parent=1 // loop_footer
      %s21 = sadd.s32 1, %s17
    $region7: #{tpu_custom_call.1} parent=1 // loop_footer_branch
      %16 = sbr.rel target = $region3
    $region8: #{tpu_custom_call.1} parent=1 // loop_exit
      _
    %228 = vsyncpa [#allocation5], 1
    %s229 = scalar_lea.sflag [#allocation5], 1
    %230 = vsyncpa %s229, 1
    %231 = vsyncpa [#allocation6], 1
    %s232 = scalar_lea.sflag [#allocation6], 1
    %233 = vsyncpa %s232, 1

</llo_original>
